<compile_context>
chip_gen: v7x
topology: tpu7x:2x2x1
jax: 0.10.0
libtpu: 0.0.40
codegen_flags: <defaults>
</compile_context>

<pallas_src>
import math

import jax
import jax.numpy as jnp
from jax import lax
from jax.experimental import pallas as pl
from jax.experimental.pallas import tpu as pltpu

_LANE = 128


def _round_up(x, m):
    return ((x + m - 1) // m) * m


def _cdiv(a, b):
    return (a + b - 1) // b


# ---------------------------------------------------------------------------
# Parameter construction (deterministic, mirrors MemoryMLP.__init__:
# xavier_uniform_ weights, zero bias).
# ---------------------------------------------------------------------------
def init_memory_mlp_params(key, dim, depth, expansion_factor=2.0):
    """Returns list of (W, b) with W already transposed to (in, out)."""
    if depth < 1:
        return []
    dim_hidden = int(dim * expansion_factor)
    params = []
    current_dim = dim
    for i in range(depth):
        is_last = i == depth - 1
        out_dim = dim if is_last else dim_hidden
        key, wk = jax.random.split(key)
        bound = math.sqrt(6.0 / (current_dim + out_dim))
        w_torch_layout = jax.random.uniform(
            wk, (out_dim, current_dim), jnp.float32, minval=-bound, maxval=bound
        )
        params.append((w_torch_layout.T, jnp.zeros((out_dim,), jnp.float32)))
        current_dim = out_dim
    return params


# ---------------------------------------------------------------------------
# One-time parameter preparation: pad feature dims + cast to the MXU compute
# dtype.  Layer-0 in-dim stays UNPADDED (so the x DMA is not inflated); every
# out-dim (and subsequent in-dim) is padded to a multiple of 128.  Padded
# weight rows/cols and bias entries are zero, so padded lanes stay exactly 0
# through bias and GELU (GELU(0)=0) and are sliced off in the wrapper.
# ---------------------------------------------------------------------------
def prepare_memory_mlp_params(params, compute_dtype=jnp.float32):
    if len(params) == 0:
        return {"layers": [], "dim_in": None, "dim_out": None,
                "compute_dtype": compute_dtype}
    layers = []
    prev_out_pad = None
    for li, (w, b) in enumerate(params):
        in_dim, out_dim = w.shape
        in_pad = in_dim if li == 0 else prev_out_pad
        out_pad = _round_up(out_dim, _LANE)
        wp = jnp.zeros((in_pad, out_pad), jnp.float32).at[:in_dim, :out_dim].set(w)
        bp = jnp.zeros((1, out_pad), jnp.float32).at[0, :out_dim].set(b)
        layers.append((wp.astype(compute_dtype), bp))  # bias stays f32
        prev_out_pad = out_pad
    return {"layers": layers,
            "dim_in": params[0][0].shape[0],
            "dim_out": params[-1][0].shape[1],
            "compute_dtype": compute_dtype}


# ---------------------------------------------------------------------------
# Pallas kernel: one tile of rows through the whole MLP (weights resident)
# ---------------------------------------------------------------------------
def _make_mlp_kernel(depth, compute_dtype, approximate_gelu):
    inv_sqrt2 = 1.0 / math.sqrt(2.0)

    def kernel(*refs):
        # refs = (x_ref, w0, b0, w1, b1, ..., o_ref)
        x_ref = refs[0]
        o_ref = refs[-1]
        wb = refs[1:-1]

        h = x_ref[...]
        for i in range(depth):
            w = wb[2 * i][...]         # already in compute_dtype
            b = wb[2 * i + 1][...]     # f32, shape (1, out)
            h = h.astype(compute_dtype)  # no-op when dtypes already match
            h = jnp.dot(h, w, preferred_element_type=jnp.float32)  # MXU, f32 acc
            h = h + b                   # broadcast over rows
            if i != depth - 1:
                if approximate_gelu:
                    h = jax.nn.gelu(h, approximate=True)   # tanh -> EUP slot
                else:
                    h = 0.5 * h * (1.0 + lax.erf(h * inv_sqrt2))  # PyTorch-exact
        o_ref[...] = h.astype(o_ref.dtype)

    return kernel


def _resident_spec(shape, single_buffer):
    """Constant-index (VMEM-resident) block; single-buffered when supported."""
    if single_buffer and hasattr(pl, "Buffered"):
        try:
            return pl.BlockSpec(shape, lambda i: (0, 0), pipeline_mode=pl.Buffered(1))
        except TypeError:
            pass
    return pl.BlockSpec(shape, lambda i: (0, 0))


# ---------------------------------------------------------------------------
# Wrapper
# ---------------------------------------------------------------------------
def memory_mlp_forward(
    x,
    prepared,                 # result of prepare_memory_mlp_params
    *,
    tile_rows=2048,           # sweepable; large tiles amortize per-step overhead
    approximate_gelu=False,   # True: tanh-GELU (EUP, ~free) -- recommended v6e/v7x
    out_dtype=None,           # e.g. jnp.bfloat16 on v5e to halve writeback
    min_grid_steps=2,         # >=2 row tiles so v7x megacore uses both TCs
):
    layers = prepared["layers"]
    if len(layers) == 0:      # depth < 1  -> nn.Identity()
        return x

    compute_dtype = prepared["compute_dtype"]
    depth = len(layers)
    dim_in = prepared["dim_in"]
    dim_out = prepared["dim_out"]
    out_pad_last = layers[-1][0].shape[1]
    out_dtype = x.dtype if out_dtype is None else out_dtype

    orig_shape = x.shape
    assert orig_shape[-1] == dim_in, "last dim of x must match the MLP input dim"
    x2d = x.reshape(-1, dim_in)
    n_rows = x2d.shape[0]

    # Cast input once in the wrapper (halves input DMA when compute is bf16).
    if jnp.dtype(compute_dtype).itemsize < x2d.dtype.itemsize:
        x2d = x2d.astype(compute_dtype)
    x_itemsize = x2d.dtype.itemsize
    row_align = 8 if x_itemsize >= 4 else (16 if x_itemsize == 2 else 32)

    # Row tiling: >= min_grid_steps tiles when possible (megacore), padding
    # waste bounded to < row_align rows per tile (never a whole garbage tile
    # of size tile_rows as before).
    n_tiles = max(1, _cdiv(n_rows, max(tile_rows, row_align)))
    if n_tiles < min_grid_steps and n_rows >= min_grid_steps * row_align:
        n_tiles = min_grid_steps
    eff_tile = _round_up(_cdiv(n_rows, n_tiles), row_align)
    n_rows_pad = n_tiles * eff_tile

    if n_rows_pad != n_rows:
        x_in = jnp.zeros((n_rows_pad, dim_in), x2d.dtype).at[:n_rows, :].set(x2d)
    else:
        x_in = x2d                      # no extra HBM pass when no padding needed

    kernel = _make_mlp_kernel(depth, compute_dtype, approximate_gelu)

    flat_params = []
    for wp, bp in layers:
        flat_params += [wp, bp]
    param_bytes = sum(p.size * p.dtype.itemsize for p in flat_params)
    max_out_pad = max(wp.shape[1] for wp, _ in layers)
    out_itemsize = jnp.dtype(out_dtype).itemsize

    # Cost estimate (advisory).
    flops = 2 * n_rows_pad * sum(wp.shape[0] * wp.shape[1] for wp, _ in layers)
    transcendentals = n_rows_pad * sum(wp.shape[1] for wp, _ in layers[:-1])
    bytes_accessed = (x_in.size * x_itemsize + param_bytes
                      + n_rows_pad * out_pad_last * out_itemsize)
    cost = pl.CostEstimate(flops=int(flops), transcendentals=int(transcendentals),
                           bytes_accessed=int(bytes_accessed))

    def _vmem_limit(param_buffers):
        io = (2 * eff_tile * dim_in * x_itemsize          # double-buffered input
              + 2 * eff_tile * out_pad_last * out_itemsize)  # double-buffered output
        act = 4 * eff_tile * max_out_pad * 4              # f32 intermediates / erf temps
        need = int(1.5 * (io + param_buffers * param_bytes + act)) + (4 << 20)
        try:
            phys = pltpu.get_tpu_info().vmem_capacity_bytes
        except Exception:
            phys = 64 << 20                               # conservative (v7x-sized)
        cap = max(32 << 20, int(0.75 * phys))             # ~48 MiB v7x, ~96 MiB v5e/v6e
        return max(16 << 20, min(need, cap))

    def _call(single_buffer_params):
        in_specs = [pl.BlockSpec((eff_tile, dim_in), lambda i: (i, 0))]
        for wp, bp in layers:
            in_specs.append(_resident_spec(wp.shape, single_buffer_params))
            in_specs.append(_resident_spec(bp.shape, single_buffer_params))
        out_spec = pl.BlockSpec((eff_tile, out_pad_last), lambda i: (i, 0))
        return pl.pallas_call(
            kernel,
            out_shape=jax.ShapeDtypeStruct((n_rows_pad, out_pad_last), out_dtype),
            grid_spec=pltpu.PrefetchScalarGridSpec(
                num_scalar_prefetch=0,
                grid=(n_tiles,),
                in_specs=in_specs,
                out_specs=out_spec,
            ),
            compiler_params=pltpu.CompilerParams(
                dimension_semantics=("parallel",),   # row tiles shard over v7x TCs
                vmem_limit_bytes=_vmem_limit(1 if single_buffer_params else 2),
            ),
            cost_estimate=cost,
        )(x_in, *flat_params)

    try:
        out = _call(True)        # single-buffered resident params (v7x VMEM win)
    except Exception:
        out = _call(False)       # fall back to default double-buffering

    if n_rows_pad != n_rows or out_pad_last != dim_out:
        out = out[:n_rows, :dim_out]
    return out.reshape(orig_shape[:-1] + (dim_out,))


# ---------------------------------------------------------------------------
# Pure-JAX reference for correctness checks
# ---------------------------------------------------------------------------
def memory_mlp_reference(x, params, approximate_gelu=False):
    if len(params) == 0:
        return x
    h = x.astype(jnp.float32)
    for i, (w, b) in enumerate(params):
        h = h @ w + b
        if i != len(params) - 1:
            if approximate_gelu:
                h = jax.nn.gelu(h, approximate=True)
            else:
                h = 0.5 * h * (1.0 + lax.erf(h / math.sqrt(2.0)))
    return h.astype(x.dtype)


if __name__ == "__main__":
    key = jax.random.PRNGKey(0)
    k_param, k1, k2, k3 = jax.random.split(key, 4)

    dim, depth, expansion = 32, 2, 2.0
    raw_params = init_memory_mlp_params(k_param, dim, depth, expansion)

    # Pad/cast parameters ONCE (not per forward call).
    params_f32 = prepare_memory_mlp_params(raw_params, jnp.float32)
    params_bf16 = prepare_memory_mlp_params(raw_params, jnp.bfloat16)

    # Case 1: small input, f32 compute, exact erf-GELU (PyTorch nn.GELU parity).
    # 16 rows -> 2 tiles of 8 (exercises the >=2-grid-step megacore path).
    x1 = jax.random.normal(k1, (2, 8, dim), jnp.float32)
    y1 = jax.block_until_ready(memory_mlp_forward(x1, params_f32))
    y1_ref = memory_mlp_reference(x1, raw_params)
    assert y1.shape == x1.shape
    assert jnp.allclose(y1, y1_ref, atol=1e-3, rtol=1e-3), "f32 mismatch vs reference"

    # Case 2: 384 rows, bf16 matmul inputs (f32 MXU accumulation), tanh-GELU.
    # Tile shrinks to 192 x 2 -> zero row-padding waste, bf16 input DMA.
    x2 = jax.random.normal(k2, (4, 96, dim), jnp.float32)
    y2 = jax.block_until_ready(
        memory_mlp_forward(x2, params_bf16, approximate_gelu=True))
    y2_ref = memory_mlp_reference(x2, raw_params, approximate_gelu=True)
    assert y2.shape == x2.shape
    assert jnp.allclose(y2, y2_ref, atol=5e-2, rtol=5e-2), "bf16 mismatch vs reference"

    # Case 3: 15 rows (not a multiple of 8) -> exercises bounded row padding.
    x3 = jax.random.normal(k3, (3, 5, dim), jnp.float32)
    y3 = jax.block_until_ready(memory_mlp_forward(x3, params_f32))
    y3_ref = memory_mlp_reference(x3, raw_params)
    assert y3.shape == x3.shape
    assert jnp.allclose(y3, y3_ref, atol=1e-3, rtol=1e-3), "padded-rows mismatch"

    # depth < 1 -> nn.Identity()
    ident = memory_mlp_forward(x1, prepare_memory_mlp_params([], jnp.float32))
    assert jnp.array_equal(ident, x1)

    print("KERNEL_OK")
</pallas_src>

<mosaic_0001>
module attributes {stable_mosaic.version = 11 : i64} {
  func.func @kernel(%arg0: i32, %arg1: memref<8x32xf32, #tpu.memory_space<vmem>>, %arg2: memref<32x128xf32, #tpu.memory_space<vmem>>, %arg3: memref<1x128xf32, #tpu.memory_space<vmem>>, %arg4: memref<128x128xf32, #tpu.memory_space<vmem>>, %arg5: memref<1x128xf32, #tpu.memory_space<vmem>>, %arg6: memref<8x128xf32, #tpu.memory_space<vmem>>) attributes {dimension_semantics = [#tpu.dimension_semantics<parallel>], iteration_bounds = array<i64: 2>, scalar_prefetch = 0 : i64, scratch_operands = 0 : i64, tpu.core_type = #tpu.core_type<tc>, window_params = [{transform_indices = @transform_0, window_bounds = array<i64: 8, 32>}, {pipeline_mode = #tpu.pipeline_mode<synchronous>, transform_indices = @transform_1, window_bounds = array<i64: 32, 128>}, {pipeline_mode = #tpu.pipeline_mode<synchronous>, transform_indices = @transform_2, window_bounds = array<i64: 1, 128>}, {pipeline_mode = #tpu.pipeline_mode<synchronous>, transform_indices = @transform_3, window_bounds = array<i64: 128, 128>}, {pipeline_mode = #tpu.pipeline_mode<synchronous>, transform_indices = @transform_4, window_bounds = array<i64: 1, 128>}, {transform_indices = @transform_5, window_bounds = array<i64: 8, 128>}]} {
    %c0 = arith.constant 0 : index
    %c0_0 = arith.constant 0 : index
    %0 = vector.load %arg1[%c0, %c0_0] : memref<8x32xf32, #tpu.memory_space<vmem>>, vector<8x32xf32>
    %c0_1 = arith.constant 0 : index
    %c0_2 = arith.constant 0 : index
    %1 = vector.load %arg2[%c0_1, %c0_2] : memref<32x128xf32, #tpu.memory_space<vmem>>, vector<32x128xf32>
    %c0_3 = arith.constant 0 : index
    %c0_4 = arith.constant 0 : index
    %2 = vector.load %arg3[%c0_3, %c0_4] : memref<1x128xf32, #tpu.memory_space<vmem>>, vector<1x128xf32>
    %cst = arith.constant dense<0.000000e+00> : vector<8x128xf32>
    %3 = tpu.matmul %0, %1, %cst {dimension_numbers = #tpu.dot_dimension_numbers<[1], [0], [0], [1], [0, 0, 1, 1], [], []>} : vector<8x32xf32>, vector<32x128xf32>, vector<8x128xf32> -> vector<8x128xf32>
    %4 = vector.broadcast %2 : vector<1x128xf32> to vector<8x128xf32>
    %5 = arith.addf %3, %4 : vector<8x128xf32>
    %cst_5 = arith.constant 5.000000e-01 : f32
    %6 = vector.broadcast %cst_5 : f32 to vector<8x128xf32>
    %7 = arith.mulf %6, %5 : vector<8x128xf32>
    %cst_6 = arith.constant 0.707106769 : f32
    %8 = vector.broadcast %cst_6 : f32 to vector<8x128xf32>
    %9 = arith.mulf %5, %8 : vector<8x128xf32>
    %10 = math.erf %9 : vector<8x128xf32>
    %cst_7 = arith.constant 1.000000e+00 : f32
    %11 = vector.broadcast %cst_7 : f32 to vector<8x128xf32>
    %12 = arith.addf %11, %10 : vector<8x128xf32>
    %13 = arith.mulf %7, %12 : vector<8x128xf32>
    %c0_8 = arith.constant 0 : index
    %c0_9 = arith.constant 0 : index
    %14 = vector.load %arg4[%c0_8, %c0_9] : memref<128x128xf32, #tpu.memory_space<vmem>>, vector<128x128xf32>
    %c0_10 = arith.constant 0 : index
    %c0_11 = arith.constant 0 : index
    %15 = vector.load %arg5[%c0_10, %c0_11] : memref<1x128xf32, #tpu.memory_space<vmem>>, vector<1x128xf32>
    %cst_12 = arith.constant dense<0.000000e+00> : vector<8x128xf32>
    %16 = tpu.matmul %13, %14, %cst_12 {dimension_numbers = #tpu.dot_dimension_numbers<[1], [0], [0], [1], [0, 0, 1, 1], [], []>} : vector<8x128xf32>, vector<128x128xf32>, vector<8x128xf32> -> vector<8x128xf32>
    %17 = vector.broadcast %15 : vector<1x128xf32> to vector<8x128xf32>
    %18 = arith.addf %16, %17 : vector<8x128xf32>
    %c0_13 = arith.constant 0 : index
    %c0_14 = arith.constant 0 : index
    %19 = vector.load %arg6[%c0_13, %c0_14] : memref<8x128xf32, #tpu.memory_space<vmem>>, vector<8x128xf32>
    tpu.vector_store %arg6[%c0_13, %c0_14], %18 {strides = array<i32>} : memref<8x128xf32, #tpu.memory_space<vmem>>, vector<8x128xf32>,
    return
  }
  func.func @transform_0(%arg0: i32) -> (i32, i32) {
    %c0_i32 = arith.constant 0 : i32
    %c0_i32_0 = arith.constant 0 : i32
    return %arg0, %c0_i32 : i32, i32
  }
  func.func @transform_1(%arg0: i32) -> (i32, i32) {
    %c0_i32 = arith.constant 0 : i32
    %c0_i32_0 = arith.constant 0 : i32
    %c0_i32_1 = arith.constant 0 : i32
    return %c0_i32, %c0_i32_0 : i32, i32
  }
  func.func @transform_2(%arg0: i32) -> (i32, i32) {
    %c0_i32 = arith.constant 0 : i32
    %c0_i32_0 = arith.constant 0 : i32
    %c0_i32_1 = arith.constant 0 : i32
    return %c0_i32, %c0_i32_0 : i32, i32
  }
  func.func @transform_3(%arg0: i32) -> (i32, i32) {
    %c0_i32 = arith.constant 0 : i32
    %c0_i32_0 = arith.constant 0 : i32
    %c0_i32_1 = arith.constant 0 : i32
    return %c0_i32, %c0_i32_0 : i32, i32
  }
  func.func @transform_4(%arg0: i32) -> (i32, i32) {
    %c0_i32 = arith.constant 0 : i32
    %c0_i32_0 = arith.constant 0 : i32
    %c0_i32_1 = arith.constant 0 : i32
    return %c0_i32, %c0_i32_0 : i32, i32
  }
  func.func @transform_5(%arg0: i32) -> (i32, i32) {
    %c0_i32 = arith.constant 0 : i32
    %c0_i32_0 = arith.constant 0 : i32
    return %arg0, %c0_i32 : i32, i32
  }
}

module attributes {stable_mosaic.version = 11 : i64} {
  func.func @kernel(%arg0: i32, %arg1: memref<8x32xf32, #tpu.memory_space<vmem>>, %arg2: memref<32x128xf32, #tpu.memory_space<vmem>>, %arg3: memref<1x128xf32, #tpu.memory_space<vmem>>, %arg4: memref<128x128xf32, #tpu.memory_space<vmem>>, %arg5: memref<1x128xf32, #tpu.memory_space<vmem>>, %arg6: memref<8x128xf32, #tpu.memory_space<vmem>>) attributes {dimension_semantics = [#tpu.dimension_semantics<parallel>], iteration_bounds = array<i64: 2>, scalar_prefetch = 0 : i64, scratch_operands = 0 : i64, tpu.core_type = #tpu.core_type<tc>, window_params = [{transform_indices = @transform_0, window_bounds = array<i64: 8, 32>}, {pipeline_mode = #tpu.pipeline_mode<synchronous>, transform_indices = @transform_1, window_bounds = array<i64: 32, 128>}, {pipeline_mode = #tpu.pipeline_mode<synchronous>, transform_indices = @transform_2, window_bounds = array<i64: 1, 128>}, {pipeline_mode = #tpu.pipeline_mode<synchronous>, transform_indices = @transform_3, window_bounds = array<i64: 128, 128>}, {pipeline_mode = #tpu.pipeline_mode<synchronous>, transform_indices = @transform_4, window_bounds = array<i64: 1, 128>}, {transform_indices = @transform_5, window_bounds = array<i64: 8, 128>}]} {
    %c0 = arith.constant 0 : index
    %c0_0 = arith.constant 0 : index
    %0 = vector.load %arg1[%c0, %c0_0] : memref<8x32xf32, #tpu.memory_space<vmem>>, vector<8x32xf32>
    %c0_1 = arith.constant 0 : index
    %c0_2 = arith.constant 0 : index
    %1 = vector.load %arg2[%c0_1, %c0_2] : memref<32x128xf32, #tpu.memory_space<vmem>>, vector<32x128xf32>
    %c0_3 = arith.constant 0 : index
    %c0_4 = arith.constant 0 : index
    %2 = vector.load %arg3[%c0_3, %c0_4] : memref<1x128xf32, #tpu.memory_space<vmem>>, vector<1x128xf32>
    %cst = arith.constant dense<0.000000e+00> : vector<8x128xf32>
    %3 = tpu.matmul %0, %1, %cst {dimension_numbers = #tpu.dot_dimension_numbers<[1], [0], [0], [1], [0, 0, 1, 1], [], []>} : vector<8x32xf32>, vector<32x128xf32>, vector<8x128xf32> -> vector<8x128xf32>
    %4 = vector.broadcast %2 : vector<1x128xf32> to vector<8x128xf32>
    %5 = arith.addf %3, %4 : vector<8x128xf32>
    %cst_5 = arith.constant 5.000000e-01 : f32
    %6 = vector.broadcast %cst_5 : f32 to vector<8x128xf32>
    %7 = arith.mulf %6, %5 : vector<8x128xf32>
    %cst_6 = arith.constant 0.707106769 : f32
    %8 = vector.broadcast %cst_6 : f32 to vector<8x128xf32>
    %9 = arith.mulf %5, %8 : vector<8x128xf32>
    %10 = math.erf %9 : vector<8x128xf32>
    %cst_7 = arith.constant 1.000000e+00 : f32
    %11 = vector.broadcast %cst_7 : f32 to vector<8x128xf32>
    %12 = arith.addf %11, %10 : vector<8x128xf32>
    %13 = arith.mulf %7, %12 : vector<8x128xf32>
    %c0_8 = arith.constant 0 : index
    %c0_9 = arith.constant 0 : index
    %14 = vector.load %arg4[%c0_8, %c0_9] : memref<128x128xf32, #tpu.memory_space<vmem>>, vector<128x128xf32>
    %c0_10 = arith.constant 0 : index
    %c0_11 = arith.constant 0 : index
    %15 = vector.load %arg5[%c0_10, %c0_11] : memref<1x128xf32, #tpu.memory_space<vmem>>, vector<1x128xf32>
    %cst_12 = arith.constant dense<0.000000e+00> : vector<8x128xf32>
    %16 = tpu.matmul %13, %14, %cst_12 {dimension_numbers = #tpu.dot_dimension_numbers<[1], [0], [0], [1], [0, 0, 1, 1], [], []>} : vector<8x128xf32>, vector<128x128xf32>, vector<8x128xf32> -> vector<8x128xf32>
    %17 = vector.broadcast %15 : vector<1x128xf32> to vector<8x128xf32>
    %18 = arith.addf %16, %17 : vector<8x128xf32>
    %c0_13 = arith.constant 0 : index
    %c0_14 = arith.constant 0 : index
    %19 = vector.load %arg6[%c0_13, %c0_14] : memref<8x128xf32, #tpu.memory_space<vmem>>, vector<8x128xf32>
    tpu.vector_store %arg6[%c0_13, %c0_14], %18 {strides = array<i32>} : memref<8x128xf32, #tpu.memory_space<vmem>>, vector<8x128xf32>,
    return
  }
  func.func @transform_0(%arg0: i32) -> (i32, i32) {
    %c0_i32 = arith.constant 0 : i32
    %c0_i32_0 = arith.constant 0 : i32
    return %arg0, %c0_i32 : i32, i32
  }
  func.func @transform_1(%arg0: i32) -> (i32, i32) {
    %c0_i32 = arith.constant 0 : i32
    %c0_i32_0 = arith.constant 0 : i32
    %c0_i32_1 = arith.constant 0 : i32
    return %c0_i32, %c0_i32_0 : i32, i32
  }
  func.func @transform_2(%arg0: i32) -> (i32, i32) {
    %c0_i32 = arith.constant 0 : i32
    %c0_i32_0 = arith.constant 0 : i32
    %c0_i32_1 = arith.constant 0 : i32
    return %c0_i32, %c0_i32_0 : i32, i32
  }
  func.func @transform_3(%arg0: i32) -> (i32, i32) {
    %c0_i32 = arith.constant 0 : i32
    %c0_i32_0 = arith.constant 0 : i32
    %c0_i32_1 = arith.constant 0 : i32
    return %c0_i32, %c0_i32_0 : i32, i32
  }
  func.func @transform_4(%arg0: i32) -> (i32, i32) {
    %c0_i32 = arith.constant 0 : i32
    %c0_i32_0 = arith.constant 0 : i32
    %c0_i32_1 = arith.constant 0 : i32
    return %c0_i32, %c0_i32_0 : i32, i32
  }
  func.func @transform_5(%arg0: i32) -> (i32, i32) {
    %c0_i32 = arith.constant 0 : i32
    %c0_i32_0 = arith.constant 0 : i32
    return %arg0, %c0_i32 : i32, i32
  }
}

</mosaic_0001>

<llo_original>
// kernel: tpu_custom_call.1
$region0: #{tpu_custom_call.1}
  #allocation0 [shape = 'u32[]', space=smem, size = 0x4, offset = 0x4, fixed_abs, tag = 'smem constant byte address 0x4 - core index']
  #allocation1 [shape = 'u32[144,128]{1,0:T(1,128)}', space=vmem, size = 0x12000, scoped, tag = 'internal scratch']
  %s0 = inlined_call_operand.hbm [shape: f32[16,32], index: 0, kind: input, shape index: {}]
  %s1 = inlined_call_operand.hbm [shape: f32[32,128], index: 1, kind: input, shape index: {}]
  %s2 = inlined_call_operand.vmem [shape: f32[1,128], index: 2, kind: input, shape index: {}]
  %s3 = inlined_call_operand.hbm [shape: f32[128,128], index: 3, kind: input, shape index: {}]
  %s4 = inlined_call_operand.vmem [shape: f32[1,128], index: 4, kind: input, shape index: {}]
  %s5 = inlined_call_operand.hbm [shape: f32[16,128], index: 5, kind: output, shape index: {}]
  %s6 = sld [smem:[#allocation0]]
  $region65: #{tpu_custom_call.1} parent=0
    _
  %s8 = ssub.s32 1, %s6
  %s9 = scalar_select 0, %s8, %s6
  $region1: #{tpu_custom_call.1} parent=0
    #allocation2 [shape = 'u8[8192]{0}', space=vmem, size = 0x2000, scoped, tag = 'input window, operand 0']
    #allocation3 [shape = 's32[2]{0}', space=sflag, size = 0x8, scoped, tag = 'scoped memory for tpu_custom_call.1']
    #allocation4 [shape = 's32[2]{0}', space=sflag, size = 0x8, scoped, tag = 'scoped memory for tpu_custom_call.1']
    #allocation5 [shape = 'u8[16384]{0}', space=vmem, size = 0x4000, scoped, tag = 'input window, operand 1, single buffered']
    #allocation6 [shape = 's32[1]{0}', space=sflag, size = 0x4, scoped, tag = 'scoped memory for tpu_custom_call.1']
    #allocation7 [shape = 'u8[65536]{0}', space=vmem, size = 0x10000, scoped, tag = 'input window, operand 3, single buffered']
    #allocation8 [shape = 'u8[8192]{0}', space=vmem, size = 0x2000, scoped, tag = 'output window, operand 0']
    %10 = vsyncpa [#allocation3], 0
    %s11 = scalar_lea.sflag [#allocation3], 1
    %12 = vsyncpa %s11, 0
    %13 = vsyncpa [#allocation6], 0
    %14 = vsyncpa [#allocation4], 0
    %s15 = scalar_lea.sflag [#allocation4], 1
    %16 = vsyncpa %s15, 0
    loop: start=0, step=1, limit=4
    $region2: #{tpu_custom_call.1} parent=1 // loop_pre_header
      _
    $region3: #{tpu_custom_call.1} parent=1 // loop_header
      %s18 = sphi 0, %s22
      %p19 = scmp.ge.s32.totalorder %s18, 4
      %s28 = sphi 0, %s30
      %s31 = sphi 0, %s28
      %s32 = sphi 0, %s31
      %s48 = sphi 0, %s32
      %s52 = sphi 0, %s52
      %s54 = sphi 0, %s52
      %s55 = sphi 0, %s54
      %s69 = sphi 0, %s55
      %s73 = sphi 0, %s73
      %s75 = sphi 0, %s73
      %s76 = sphi 0, %s75
      %s90 = sphi 0, %s76
      %s94 = sphi 0, %s94
      %s96 = sphi 0, %s94
      %s97 = sphi 0, %s96
      %s111 = sphi 0, %s97
      %s115 = sphi 0, %s115
      %s117 = sphi 0, %s115
      %s118 = sphi 0, %s117
      %s132 = sphi 0, %s118
      %s138 = sphi 0, %s140
      %s141 = sphi 0, %s138
      %s142 = sphi 0, %s141
      %s158 = sphi 0, %s142
    $region4: #{tpu_custom_call.1} parent=1 // loop_header_branch
      %21 = sbr.rel (%p19) target = $region8
    $region5: #{tpu_custom_call.1} parent=1 // loop_body
      %s23 = ssub.s32 %s18, 1
      %s24 = ssub.s32 %s18, 2
      %s25 = sadd.s32 %s18, 1
      %s26 = ssub.s32 %s18, %s25
      %p27 = scmp.eq.s32.totalorder %s26, 0
      %s29 = sadd.s32 %s28, 1
      %s30 = scalar_select %p27, %s28, %s29
      %p33 = pneg %p27
      %p34 = scmp.eq.s32.totalorder %s18, 1
      %p35 = por %p33, %p34
      %p36 = scmp.ne.s32.totalorder %s28, %s31
      %p37 = scmp.eq.s32.totalorder %s18, 0
      %p38 = por %p36, %p37
      %p39 = scmp.ne.s32.totalorder %s28, %s31
      %p40 = scmp.eq.s32.totalorder %s23, 1
      %p41 = por %p39, %p40
      %p42 = scmp.ne.s32.totalorder %s31, %s32
      %p43 = scmp.eq.s32.totalorder %s23, 0
      %p44 = por %p42, %p43
      %p45 = scmp.ne.s32.totalorder %s31, %s32
      %p46 = scmp.eq.s32.totalorder %s24, 1
      %p47 = por %p45, %p46
      %p49 = scmp.ne.s32.totalorder %s32, %s48
      %p50 = scmp.eq.s32.totalorder %s24, 0
      %p51 = por %p49, %p50
      %s53 = sadd.s32 %s52, 1
      %p56 = scmp.eq.s32.totalorder %s18, 1
      %p57 = scmp.ne.s32.totalorder %s52, %s54
      %p58 = scmp.eq.s32.totalorder %s18, 0
      %p59 = por %p57, %p58
      %p60 = scmp.ne.s32.totalorder %s52, %s54
      %p61 = scmp.eq.s32.totalorder %s23, 1
      %p62 = por %p60, %p61
      %p63 = scmp.ne.s32.totalorder %s54, %s55
      %p64 = scmp.eq.s32.totalorder %s23, 0
      %p65 = por %p63, %p64
      %p66 = scmp.ne.s32.totalorder %s54, %s55
      %p67 = scmp.eq.s32.totalorder %s24, 1
      %p68 = por %p66, %p67
      %p70 = scmp.ne.s32.totalorder %s55, %s69
      %p71 = scmp.eq.s32.totalorder %s24, 0
      %p72 = por %p70, %p71
      %s74 = sadd.s32 %s73, 1
      %p77 = scmp.eq.s32.totalorder %s18, 1
      %p78 = scmp.ne.s32.totalorder %s73, %s75
      %p79 = scmp.eq.s32.totalorder %s18, 0
      %p80 = por %p78, %p79
      %p81 = scmp.ne.s32.totalorder %s73, %s75
      %p82 = scmp.eq.s32.totalorder %s23, 1
      %p83 = por %p81, %p82
      %p84 = scmp.ne.s32.totalorder %s75, %s76
      %p85 = scmp.eq.s32.totalorder %s23, 0
      %p86 = por %p84, %p85
      %p87 = scmp.ne.s32.totalorder %s75, %s76
      %p88 = scmp.eq.s32.totalorder %s24, 1
      %p89 = por %p87, %p88
      %p91 = scmp.ne.s32.totalorder %s76, %s90
      %p92 = scmp.eq.s32.totalorder %s24, 0
      %p93 = por %p91, %p92
      %s95 = sadd.s32 %s94, 1
      %p98 = scmp.eq.s32.totalorder %s18, 1
      %p99 = scmp.ne.s32.totalorder %s94, %s96
      %p100 = scmp.eq.s32.totalorder %s18, 0
      %p101 = por %p99, %p100
      %p102 = scmp.ne.s32.totalorder %s94, %s96
      %p103 = scmp.eq.s32.totalorder %s23, 1
      %p104 = por %p102, %p103
      %p105 = scmp.ne.s32.totalorder %s96, %s97
      %p106 = scmp.eq.s32.totalorder %s23, 0
      %p107 = por %p105, %p106
      %p108 = scmp.ne.s32.totalorder %s96, %s97
      %p109 = scmp.eq.s32.totalorder %s24, 1
      %p110 = por %p108, %p109
      %p112 = scmp.ne.s32.totalorder %s97, %s111
      %p113 = scmp.eq.s32.totalorder %s24, 0
      %p114 = por %p112, %p113
      %s116 = sadd.s32 %s115, 1
      %p119 = scmp.eq.s32.totalorder %s18, 1
      %p120 = scmp.ne.s32.totalorder %s115, %s117
      %p121 = scmp.eq.s32.totalorder %s18, 0
      %p122 = por %p120, %p121
      %p123 = scmp.ne.s32.totalorder %s115, %s117
      %p124 = scmp.eq.s32.totalorder %s23, 1
      %p125 = por %p123, %p124
      %p126 = scmp.ne.s32.totalorder %s117, %s118
      %p127 = scmp.eq.s32.totalorder %s23, 0
      %p128 = por %p126, %p127
      %p129 = scmp.ne.s32.totalorder %s117, %s118
      %p130 = scmp.eq.s32.totalorder %s24, 1
      %p131 = por %p129, %p130
      %p133 = scmp.ne.s32.totalorder %s118, %s132
      %p134 = scmp.eq.s32.totalorder %s24, 0
      %p135 = por %p133, %p134
      %s136 = ssub.s32 %s18, %s25
      %p137 = scmp.eq.s32.totalorder %s136, 0
      %s139 = sadd.s32 %s138, 1
      %s140 = scalar_select %p137, %s138, %s139
      %p143 = pneg %p137
      %p144 = scmp.eq.s32.totalorder %s18, 1
      %p145 = por %p143, %p144
      %p146 = scmp.ne.s32.totalorder %s138, %s141
      %p147 = scmp.eq.s32.totalorder %s18, 0
      %p148 = por %p146, %p147
      %p149 = scmp.ne.s32.totalorder %s138, %s141
      %p150 = scmp.eq.s32.totalorder %s23, 1
      %p151 = por %p149, %p150
      %p152 = scmp.ne.s32.totalorder %s141, %s142
      %p153 = scmp.eq.s32.totalorder %s23, 0
      %p154 = por %p152, %p153
      %p155 = scmp.ne.s32.totalorder %s141, %s142
      %p156 = scmp.eq.s32.totalorder %s24, 1
      %p157 = por %p155, %p156
      %p159 = scmp.ne.s32.totalorder %s142, %s158
      %p160 = scmp.eq.s32.totalorder %s24, 0
      %p161 = por %p159, %p160
      %p162 = scmp.le.s32.totalorder 1, %s18
      %p163 = scmp.lt.s32.totalorder %s18, 3
      %p164 = pnand %p162, %p163
      %p165 = pneg %p164
      // Predicated region
      $region9: #{tpu_custom_call.1} parent=5 // pred_check
        _
      $region10: #{tpu_custom_call.1} parent=5 // pred_check_branch
        %167 = sbr.rel (%p164) target = $region12
      $region11: #{tpu_custom_call.1} parent=5 // pred_region
        %s168 = ssub.s32 %s18, 1
        // Predicated region
        $region13: #{tpu_custom_call.1} parent=11 // pred_check
          %p169 = pneg %p65
        $region14: #{tpu_custom_call.1} parent=11 // pred_check_branch
          %171 = sbr.rel (%p169) target = $region16
        $region15: #{tpu_custom_call.1} parent=11 // pred_region
          %s173 = ssub.s32 512, 512
          %174 = vsyncadd [#allocation6], %s173
          %s175 = sshll.u32 [#allocation5], 4
          %s176 = int_to_ptr.vmem [resolvable:$true] %s175
          %181 = dma.hbm_to_vmem [thread:$0]  %s1, 512, %s176, [#allocation6], 128, 128, 8
        $region16: #{tpu_custom_call.1} parent=11 // pred_fallthru
          _
        // Predicated region
        $region17: #{tpu_custom_call.1} parent=11 // pred_check
          %p182 = pneg %p86
        $region18: #{tpu_custom_call.1} parent=11 // pred_check_branch
          %184 = sbr.rel (%p182) target = $region20
        $region19: #{tpu_custom_call.1} parent=11 // pred_region
          _
        $region20: #{tpu_custom_call.1} parent=11 // pred_fallthru
          _
        // Predicated region
        $region21: #{tpu_custom_call.1} parent=11 // pred_check
          %p185 = pneg %p107
        $region22: #{tpu_custom_call.1} parent=11 // pred_check_branch
          %187 = sbr.rel (%p185) target = $region24
        $region23: #{tpu_custom_call.1} parent=11 // pred_region
          %s189 = ssub.s32 2048, 2048
          %190 = vsyncadd [#allocation6], %s189
          %s191 = sshll.u32 [#allocation7], 4
          %s192 = int_to_ptr.vmem [resolvable:$true] %s191
          %197 = dma.hbm_to_vmem [thread:$0]  %s3, 2048, %s192, [#allocation6], 128, 128, 8
        $region24: #{tpu_custom_call.1} parent=11 // pred_fallthru
          _
        // Predicated region
        $region25: #{tpu_custom_call.1} parent=11 // pred_check
          %p198 = pneg %p128
        $region26: #{tpu_custom_call.1} parent=11 // pred_check_branch
          %200 = sbr.rel (%p198) target = $region28
        $region27: #{tpu_custom_call.1} parent=11 // pred_region
          _
        $region28: #{tpu_custom_call.1} parent=11 // pred_fallthru
          _
      $region12: #{tpu_custom_call.1} parent=5 // pred_fallthru
        _
      %p201 = scmp.lt.s32.totalorder %s18, 2
      // Predicated region
      $region29: #{tpu_custom_call.1} parent=5 // pred_check
        %p202 = pneg %p201
      $region30: #{tpu_custom_call.1} parent=5 // pred_check_branch
        %204 = sbr.rel (%p202) target = $region32
      $region31: #{tpu_custom_call.1} parent=5 // pred_region
        // Predicated region
        $region33: #{tpu_custom_call.1} parent=31 // pred_check
          %p205 = pneg %p38
        $region34: #{tpu_custom_call.1} parent=31 // pred_check_branch
          %207 = sbr.rel (%p205) target = $region36
        $region35: #{tpu_custom_call.1} parent=31 // pred_region
          %s208 = sand.u32 %s28, 1
          %s209 = scalar_lea.sflag [#allocation3], %s208
          %s210 = sand.u32 %s28, 1
          %s211 = smul.addr %s210, 8
          %s212 = scalar_lea.vmem [#allocation2], %s211
          %s214 = ssub.s32 128, 128
          %215 = vsyncadd %s209, %s214
          %s216 = smul.addr %s18, 128
          %s217 = scalar_lea.hbm %s0, %s216
          %s219 = sshll.u32 %s212, 4
          %s220 = int_to_ptr.vmem [resolvable:$true] %s219
          %222 = dma.hbm_to_vmem [thread:$0]  %s217, 128, %s220, %s209
        $region36: #{tpu_custom_call.1} parent=31 // pred_fallthru
          _
      $region32: #{tpu_custom_call.1} parent=5 // pred_fallthru
        _
      %p223 = scmp.le.s32.totalorder 1, %s18
      %p224 = scmp.lt.s32.totalorder %s18, 3
      %p225 = pnand %p223, %p224
      %p226 = pneg %p225
      // Predicated region
      $region37: #{tpu_custom_call.1} parent=5 // pred_check
        _
      $region38: #{tpu_custom_call.1} parent=5 // pred_check_branch
        %228 = sbr.rel (%p225) target = $region40
      $region39: #{tpu_custom_call.1} parent=5 // pred_region
        %s229 = ssub.s32 %s18, 1
        %s230 = sand.u32 %s31, 1
        %s231 = scalar_lea.sflag [#allocation3], %s230
        %s232 = sand.u32 %s31, 1
        %s233 = smul.addr %s232, 8
        %s234 = scalar_lea.vmem [#allocation2], %s233
        // Predicated region
        $region41: #{tpu_custom_call.1} parent=39 // pred_check
          %p235 = pneg %p44
        $region42: #{tpu_custom_call.1} parent=39 // pred_check_branch
          %237 = sbr.rel (%p235) target = $region44
        $region43: #{tpu_custom_call.1} parent=39 // pred_region
          %238 = dma.done %s231, 128
        $region44: #{tpu_custom_call.1} parent=39 // pred_fallthru
          _
        // Predicated region
        $region45: #{tpu_custom_call.1} parent=39 // pred_check
          %p239 = pneg %p65
        $region46: #{tpu_custom_call.1} parent=39 // pred_check_branch
          %241 = sbr.rel (%p239) target = $region48
        $region47: #{tpu_custom_call.1} parent=39 // pred_region
          %242 = dma.done [#allocation6], 512
        $region48: #{tpu_custom_call.1} parent=39 // pred_fallthru
          _
        // Predicated region
        $region49: #{tpu_custom_call.1} parent=39 // pred_check
          %p243 = pneg %p107
        $region50: #{tpu_custom_call.1} parent=39 // pred_check_branch
          %245 = sbr.rel (%p243) target = $region52
        $region51: #{tpu_custom_call.1} parent=39 // pred_region
          %246 = dma.done [#allocation6], 2048
        $region52: #{tpu_custom_call.1} parent=39 // pred_fallthru
          _
        %s247 = sand.u32 %s31, 1
        %s248 = scalar_lea.sflag [#allocation3], %s247
        %s249 = sand.u32 %s31, 1
        %s250 = smul.addr %s249, 8
        %s251 = scalar_lea.vmem [#allocation2], %s250
        %p252 = pneg %p44
        %p253 = pneg %p41
        %p254 = pneg %p65
        %p255 = pneg %p62
        %p256 = pneg %p86
        %p257 = pneg %p83
        %p258 = pneg %p107
        %p259 = pneg %p104
        %p260 = pneg %p128
        %p261 = pneg %p125
        %p262 = pneg %p154
        %p263 = pneg %p151
        %s264 = sand.u32 %s141, 1
        %s265 = scalar_lea.sflag [#allocation4], %s264
        %s266 = sand.u32 %s141, 1
        %s267 = smul.addr %s266, 8
        %s268 = scalar_lea.vmem [#allocation8], %s267
        %v269 = vld [vmem:[%s234] sm:$0xff]
        %v270 = vld [vmem:[#allocation5] sm:$0xff]
        %v271 = vld [vmem:[#allocation5 + $0x8] sm:$0xff]
        %v272 = vld [vmem:[#allocation5 + $0x10] sm:$0xff]
        %v273 = vld [vmem:[#allocation5 + $0x18] sm:$0xff]
        %v274 = vld [vmem:[%s2] sm:$0x1]
        %v276 = vlaneseq
        %v277 = vshrl.u32 %v276, 7
        %v278 = vsub.s32 0, %v277
        %v279 = vrot.slane %v274, %v278
        %vm281 = vcmask 261120
        %v283 = vsel %vm281, %v269, 0
        %285 = vmatprep.subr.mxu0 0.0
        %286 = vmatpush1.msra.mxu0 %v270
        %287 = vmatprep.subr.mxu0 0.0
        %288 = vmatpush1.msra.mxu0 %v271
        %289 = vmatprep.subr.mxu0 0.0
        %290 = vmatpush1.msra.mxu0 %v272
        %291 = vmatprep.subr.mxu0 0.0
        %292 = vmatpush1.msra.mxu0 %v273
        %293 = vmatprep.subr.mxu0 0.0
        %294 = vmatpush1.msra.mxu0 0.0
        %295 = vmatprep.subr.mxu0 0.0
        %296 = vmatpush1.msra.mxu0 0.0
        %297 = vmatprep.subr.mxu0 0.0
        %298 = vmatpush1.msra.mxu0 0.0
        %299 = vmatprep.subr.mxu0 0.0
        %300 = vmatpush1.msra.mxu0 0.0
        %301 = vmatprep.subr.mxu0 0.0
        %302 = vmatpush1.msra.mxu0 0.0
        %303 = vmatprep.subr.mxu0 0.0
        %304 = vmatpush1.msra.mxu0 0.0
        %305 = vmatprep.subr.mxu0 0.0
        %306 = vmatpush1.msra.mxu0 0.0
        %307 = vmatprep.subr.mxu0 0.0
        %308 = vmatpush1.msra.mxu0 0.0
        %309 = vmatprep.subr.mxu0 0.0
        %310 = vmatpush1.msra.mxu0 0.0
        %311 = vmatprep.subr.mxu0 0.0
        %312 = vmatpush1.msra.mxu0 0.0
        %313 = vmatprep.subr.mxu0 0.0
        %314 = vmatpush1.msra.mxu0 0.0
        %315 = vmatprep.subr.mxu0 0.0
        %316 = vmatpush1.msra.mxu0 0.0
        %317 = vmatprep.subr.mxu0 0.0
        %318 = vmatpush1.msra.mxu0 0.0
        %319 = vmatprep.subr.mxu0 0.0
        %320 = vmatpush1.msra.mxu0 0.0
        %321 = vmatprep.subr.mxu0 0.0
        %322 = vmatpush1.msra.mxu0 0.0
        %323 = vmatprep.subr.mxu0 0.0
        %324 = vmatpush1.msra.mxu0 0.0
        %325 = vmatprep.subr.mxu0 0.0
        %326 = vmatpush1.msra.mxu0 0.0
        %327 = vmatprep.subr.mxu0 0.0
        %328 = vmatpush1.msra.mxu0 0.0
        %329 = vmatprep.subr.mxu0 0.0
        %330 = vmatpush1.msra.mxu0 0.0
        %331 = vmatprep.subr.mxu0 0.0
        %332 = vmatpush1.msra.mxu0 0.0
        %333 = vmatprep.subr.mxu0 0.0
        %334 = vmatpush1.msra.mxu0 0.0
        %335 = vmatprep.subr.mxu0 0.0
        %336 = vmatpush1.msra.mxu0 0.0
        %337 = vmatprep.subr.mxu0 0.0
        %338 = vmatpush1.msra.mxu0 0.0
        %339 = vmatprep.subr.mxu0 0.0
        %340 = vmatpush1.msra.mxu0 0.0
        %341 = vmatprep.subr.mxu0 0.0
        %342 = vmatpush1.msra.mxu0 0.0
        %343 = vmatprep.subr.mxu0 0.0
        %344 = vmatpush1.msra.mxu0 0.0
        %345 = vmatprep.subr.mxu0 0.0
        %346 = vmatpush1.msra.mxu0 0.0
        %347 = vmatprep.subr.mxu0 0.0
        %348 = vmatpush1.msra.mxu0 0.0
        %349 = vmatprep.mubr.f32.mxu0 0.0
        %350 = vmatmul.mubr.f32.gmra.mrb[0].mxu0 %v283
        %v351 = vpop.f32.mrb[0].mxu0
        %v352 = vadd.f32 %v279, %v351
        %v353 = vpop.f32.mrb[0].mxu0
        %354 = vdwg.mxu0
        %v355 = vmul.f32 %v352, 0.5
        %v356 = vmul.f32 %v352, 0.70710677
        %v357 = verf.f32.pop %v356
        %v358 = vadd.f32 %v357, 1.0
        %v359 = vmul.f32 %v355, %v358
        %v360 = vld [vmem:[#allocation7] sm:$0xff]
        %v361 = vld [vmem:[#allocation7 + $0x8] sm:$0xff]
        %v362 = vld [vmem:[#allocation7 + $0x10] sm:$0xff]
        %v363 = vld [vmem:[#allocation7 + $0x18] sm:$0xff]
        %v364 = vld [vmem:[#allocation7 + $0x20] sm:$0xff]
        %v365 = vld [vmem:[#allocation7 + $0x28] sm:$0xff]
        %v366 = vld [vmem:[#allocation7 + $0x30] sm:$0xff]
        %v367 = vld [vmem:[#allocation7 + $0x38] sm:$0xff]
        %v368 = vld [vmem:[#allocation7 + $0x40] sm:$0xff]
        %v369 = vld [vmem:[#allocation7 + $0x48] sm:$0xff]
        %v370 = vld [vmem:[#allocation7 + $0x50] sm:$0xff]
        %v371 = vld [vmem:[#allocation7 + $0x58] sm:$0xff]
        %v372 = vld [vmem:[#allocation7 + $0x60] sm:$0xff]
        %v373 = vld [vmem:[#allocation7 + $0x68] sm:$0xff]
        %v374 = vld [vmem:[#allocation7 + $0x70] sm:$0xff]
        %v375 = vld [vmem:[#allocation7 + $0x78] sm:$0xff]
        %v376 = vld [vmem:[%s4] sm:$0x1]
        %v378 = vlaneseq
        %v379 = vshrl.u32 %v378, 7
        %v380 = vsub.s32 0, %v379
        %v381 = vrot.slane %v376, %v380
        %383 = vmatprep.subr.mxu0 0.0
        %384 = vmatpush1.msra.mxu0 %v360
        %385 = vmatprep.subr.mxu0 0.0
        %386 = vmatpush1.msra.mxu0 %v361
        %387 = vmatprep.subr.mxu0 0.0
        %388 = vmatpush1.msra.mxu0 %v362
        %389 = vmatprep.subr.mxu0 0.0
        %390 = vmatpush1.msra.mxu0 %v363
        %391 = vmatprep.subr.mxu0 0.0
        %392 = vmatpush1.msra.mxu0 %v364
        %393 = vmatprep.subr.mxu0 0.0
        %394 = vmatpush1.msra.mxu0 %v365
        %395 = vmatprep.subr.mxu0 0.0
        %396 = vmatpush1.msra.mxu0 %v366
        %397 = vmatprep.subr.mxu0 0.0
        %398 = vmatpush1.msra.mxu0 %v367
        %399 = vmatprep.subr.mxu0 0.0
        %400 = vmatpush1.msra.mxu0 %v368
        %401 = vmatprep.subr.mxu0 0.0
        %402 = vmatpush1.msra.mxu0 %v369
        %403 = vmatprep.subr.mxu0 0.0
        %404 = vmatpush1.msra.mxu0 %v370
        %405 = vmatprep.subr.mxu0 0.0
        %406 = vmatpush1.msra.mxu0 %v371
        %407 = vmatprep.subr.mxu0 0.0
        %408 = vmatpush1.msra.mxu0 %v372
        %409 = vmatprep.subr.mxu0 0.0
        %410 = vmatpush1.msra.mxu0 %v373
        %411 = vmatprep.subr.mxu0 0.0
        %412 = vmatpush1.msra.mxu0 %v374
        %413 = vmatprep.subr.mxu0 0.0
        %414 = vmatpush1.msra.mxu0 %v375
        %415 = vmatprep.subr.mxu0 0.0
        %416 = vmatpush1.msra.mxu0 0.0
        %417 = vmatprep.subr.mxu0 0.0
        %418 = vmatpush1.msra.mxu0 0.0
        %419 = vmatprep.subr.mxu0 0.0
        %420 = vmatpush1.msra.mxu0 0.0
        %421 = vmatprep.subr.mxu0 0.0
        %422 = vmatpush1.msra.mxu0 0.0
        %423 = vmatprep.subr.mxu0 0.0
        %424 = vmatpush1.msra.mxu0 0.0
        %425 = vmatprep.subr.mxu0 0.0
        %426 = vmatpush1.msra.mxu0 0.0
        %427 = vmatprep.subr.mxu0 0.0
        %428 = vmatpush1.msra.mxu0 0.0
        %429 = vmatprep.subr.mxu0 0.0
        %430 = vmatpush1.msra.mxu0 0.0
        %431 = vmatprep.subr.mxu0 0.0
        %432 = vmatpush1.msra.mxu0 0.0
        %433 = vmatprep.subr.mxu0 0.0
        %434 = vmatpush1.msra.mxu0 0.0
        %435 = vmatprep.subr.mxu0 0.0
        %436 = vmatpush1.msra.mxu0 0.0
        %437 = vmatprep.subr.mxu0 0.0
        %438 = vmatpush1.msra.mxu0 0.0
        %439 = vmatprep.subr.mxu0 0.0
        %440 = vmatpush1.msra.mxu0 0.0
        %441 = vmatprep.subr.mxu0 0.0
        %442 = vmatpush1.msra.mxu0 0.0
        %443 = vmatprep.subr.mxu0 0.0
        %444 = vmatpush1.msra.mxu0 0.0
        %445 = vmatprep.subr.mxu0 0.0
        %446 = vmatpush1.msra.mxu0 0.0
        %447 = vmatprep.mubr.f32.mxu0 0.0
        %448 = vmatmul.mubr.f32.gmra.mrb[0].mxu0 %v359
        %v449 = vpop.f32.mrb[0].mxu0
        %v450 = vadd.f32 %v381, %v449
        %v451 = vpop.f32.mrb[0].mxu0
        %452 = vdwg.mxu0
        %453 = vst [vmem:[%s268] sm:$0xff] %v450
        %s454 = sand.u32 %s141, 1
        %s455 = scalar_lea.sflag [#allocation4], %s454
        %s456 = sand.u32 %s141, 1
        %s457 = smul.addr %s456, 8
        %s458 = scalar_lea.vmem [#allocation8], %s457
        // Predicated region
        $region53: #{tpu_custom_call.1} parent=39 // pred_check
          %p459 = pneg %p151
        $region54: #{tpu_custom_call.1} parent=39 // pred_check_branch
          %461 = sbr.rel (%p459) target = $region56
        $region55: #{tpu_custom_call.1} parent=39 // pred_region
          %s463 = ssub.s32 128, 128
          %464 = vsyncadd %s455, %s463
          %s465 = smul.addr %s23, 128
          %s466 = scalar_lea.hbm %s5, %s465
          %s468 = sshll.u32 %s458, 4
          %s469 = int_to_ptr.vmem [resolvable:$true] %s468
          %471 = dma.vmem_to_hbm [thread:$0]  %s469, 128, %s466, %s455
        $region56: #{tpu_custom_call.1} parent=39 // pred_fallthru
          _
      $region40: #{tpu_custom_call.1} parent=5 // pred_fallthru
        _
      %p472 = scmp.le.s32.totalorder 2, %s18
      // Predicated region
      $region57: #{tpu_custom_call.1} parent=5 // pred_check
        %p473 = pneg %p472
      $region58: #{tpu_custom_call.1} parent=5 // pred_check_branch
        %475 = sbr.rel (%p473) target = $region60
      $region59: #{tpu_custom_call.1} parent=5 // pred_region
        %s476 = ssub.s32 %s18, 2
        // Predicated region
        $region61: #{tpu_custom_call.1} parent=59 // pred_check
          %p477 = pneg %p157
        $region62: #{tpu_custom_call.1} parent=59 // pred_check_branch
          %479 = sbr.rel (%p477) target = $region64
        $region63: #{tpu_custom_call.1} parent=59 // pred_region
          %s480 = sand.u32 %s142, 1
          %s481 = scalar_lea.sflag [#allocation4], %s480
          %s482 = sand.u32 %s142, 1
          %s483 = smul.addr %s482, 8
          %s484 = scalar_lea.vmem [#allocation8], %s483
          %485 = dma.done %s481, 128
        $region64: #{tpu_custom_call.1} parent=59 // pred_fallthru
          _
      $region60: #{tpu_custom_call.1} parent=5 // pred_fallthru
        _
    $region6: #{tpu_custom_call.1} parent=1 // loop_footer
      %s22 = sadd.s32 1, %s18
    $region7: #{tpu_custom_call.1} parent=1 // loop_footer_branch
      %17 = sbr.rel target = $region3
    $region8: #{tpu_custom_call.1} parent=1 // loop_exit
      _
    %486 = vsyncpa [#allocation3], 1
    %s487 = scalar_lea.sflag [#allocation3], 1
    %488 = vsyncpa %s487, 1
    %489 = vsyncpa [#allocation6], 1
    %490 = vsyncpa [#allocation4], 1
    %s491 = scalar_lea.sflag [#allocation4], 1
    %492 = vsyncpa %s491, 1

// kernel: tpu_custom_call.1
$region0: #{tpu_custom_call.1}
  #allocation0 [shape = 'u32[]', space=smem, size = 0x4, offset = 0x4, fixed_abs, tag = 'smem constant byte address 0x4 - core index']
  #allocation1 [shape = 'u32[144,128]{1,0:T(1,128)}', space=vmem, size = 0x12000, scoped, tag = 'internal scratch']
  %s0 = inlined_call_operand.hbm [shape: f32[16,32], index: 0, kind: input, shape index: {}]
  %s1 = inlined_call_operand.hbm [shape: f32[32,128], index: 1, kind: input, shape index: {}]
  %s2 = inlined_call_operand.vmem [shape: f32[1,128], index: 2, kind: input, shape index: {}]
  %s3 = inlined_call_operand.hbm [shape: f32[128,128], index: 3, kind: input, shape index: {}]
  %s4 = inlined_call_operand.vmem [shape: f32[1,128], index: 4, kind: input, shape index: {}]
  %s5 = inlined_call_operand.hbm [shape: f32[16,128], index: 5, kind: output, shape index: {}]
  %s6 = sld [smem:[#allocation0]]
  $region65: #{tpu_custom_call.1} parent=0
    _
  %s8 = ssub.s32 1, %s6
  %s9 = scalar_select 0, %s8, %s6
  $region1: #{tpu_custom_call.1} parent=0
    #allocation2 [shape = 'u8[8192]{0}', space=vmem, size = 0x2000, scoped, tag = 'input window, operand 0']
    #allocation3 [shape = 's32[2]{0}', space=sflag, size = 0x8, scoped, tag = 'scoped memory for tpu_custom_call.1']
    #allocation4 [shape = 's32[2]{0}', space=sflag, size = 0x8, scoped, tag = 'scoped memory for tpu_custom_call.1']
    #allocation5 [shape = 'u8[16384]{0}', space=vmem, size = 0x4000, scoped, tag = 'input window, operand 1, single buffered']
    #allocation6 [shape = 's32[1]{0}', space=sflag, size = 0x4, scoped, tag = 'scoped memory for tpu_custom_call.1']
    #allocation7 [shape = 'u8[65536]{0}', space=vmem, size = 0x10000, scoped, tag = 'input window, operand 3, single buffered']
    #allocation8 [shape = 'u8[8192]{0}', space=vmem, size = 0x2000, scoped, tag = 'output window, operand 0']
    %10 = vsyncpa [#allocation3], 0
    %s11 = scalar_lea.sflag [#allocation3], 1
    %12 = vsyncpa %s11, 0
    %13 = vsyncpa [#allocation6], 0
    %14 = vsyncpa [#allocation4], 0
    %s15 = scalar_lea.sflag [#allocation4], 1
    %16 = vsyncpa %s15, 0
    loop: start=0, step=1, limit=4
    $region2: #{tpu_custom_call.1} parent=1 // loop_pre_header
      _
    $region3: #{tpu_custom_call.1} parent=1 // loop_header
      %s18 = sphi 0, %s22
      %p19 = scmp.ge.s32.totalorder %s18, 4
      %s28 = sphi 0, %s30
      %s31 = sphi 0, %s28
      %s32 = sphi 0, %s31
      %s48 = sphi 0, %s32
      %s52 = sphi 0, %s52
      %s54 = sphi 0, %s52
      %s55 = sphi 0, %s54
      %s69 = sphi 0, %s55
      %s73 = sphi 0, %s73
      %s75 = sphi 0, %s73
      %s76 = sphi 0, %s75
      %s90 = sphi 0, %s76
      %s94 = sphi 0, %s94
      %s96 = sphi 0, %s94
      %s97 = sphi 0, %s96
      %s111 = sphi 0, %s97
      %s115 = sphi 0, %s115
      %s117 = sphi 0, %s115
      %s118 = sphi 0, %s117
      %s132 = sphi 0, %s118
      %s138 = sphi 0, %s140
      %s141 = sphi 0, %s138
      %s142 = sphi 0, %s141
      %s158 = sphi 0, %s142
    $region4: #{tpu_custom_call.1} parent=1 // loop_header_branch
      %21 = sbr.rel (%p19) target = $region8
    $region5: #{tpu_custom_call.1} parent=1 // loop_body
      %s23 = ssub.s32 %s18, 1
      %s24 = ssub.s32 %s18, 2
      %s25 = sadd.s32 %s18, 1
      %s26 = ssub.s32 %s18, %s25
      %p27 = scmp.eq.s32.totalorder %s26, 0
      %s29 = sadd.s32 %s28, 1
      %s30 = scalar_select %p27, %s28, %s29
      %p33 = pneg %p27
      %p34 = scmp.eq.s32.totalorder %s18, 1
      %p35 = por %p33, %p34
      %p36 = scmp.ne.s32.totalorder %s28, %s31
      %p37 = scmp.eq.s32.totalorder %s18, 0
      %p38 = por %p36, %p37
      %p39 = scmp.ne.s32.totalorder %s28, %s31
      %p40 = scmp.eq.s32.totalorder %s23, 1
      %p41 = por %p39, %p40
      %p42 = scmp.ne.s32.totalorder %s31, %s32
      %p43 = scmp.eq.s32.totalorder %s23, 0
      %p44 = por %p42, %p43
      %p45 = scmp.ne.s32.totalorder %s31, %s32
      %p46 = scmp.eq.s32.totalorder %s24, 1
      %p47 = por %p45, %p46
      %p49 = scmp.ne.s32.totalorder %s32, %s48
      %p50 = scmp.eq.s32.totalorder %s24, 0
      %p51 = por %p49, %p50
      %s53 = sadd.s32 %s52, 1
      %p56 = scmp.eq.s32.totalorder %s18, 1
      %p57 = scmp.ne.s32.totalorder %s52, %s54
      %p58 = scmp.eq.s32.totalorder %s18, 0
      %p59 = por %p57, %p58
      %p60 = scmp.ne.s32.totalorder %s52, %s54
      %p61 = scmp.eq.s32.totalorder %s23, 1
      %p62 = por %p60, %p61
      %p63 = scmp.ne.s32.totalorder %s54, %s55
      %p64 = scmp.eq.s32.totalorder %s23, 0
      %p65 = por %p63, %p64
      %p66 = scmp.ne.s32.totalorder %s54, %s55
      %p67 = scmp.eq.s32.totalorder %s24, 1
      %p68 = por %p66, %p67
      %p70 = scmp.ne.s32.totalorder %s55, %s69
      %p71 = scmp.eq.s32.totalorder %s24, 0
      %p72 = por %p70, %p71
      %s74 = sadd.s32 %s73, 1
      %p77 = scmp.eq.s32.totalorder %s18, 1
      %p78 = scmp.ne.s32.totalorder %s73, %s75
      %p79 = scmp.eq.s32.totalorder %s18, 0
      %p80 = por %p78, %p79
      %p81 = scmp.ne.s32.totalorder %s73, %s75
      %p82 = scmp.eq.s32.totalorder %s23, 1
      %p83 = por %p81, %p82
      %p84 = scmp.ne.s32.totalorder %s75, %s76
      %p85 = scmp.eq.s32.totalorder %s23, 0
      %p86 = por %p84, %p85
      %p87 = scmp.ne.s32.totalorder %s75, %s76
      %p88 = scmp.eq.s32.totalorder %s24, 1
      %p89 = por %p87, %p88
      %p91 = scmp.ne.s32.totalorder %s76, %s90
      %p92 = scmp.eq.s32.totalorder %s24, 0
      %p93 = por %p91, %p92
      %s95 = sadd.s32 %s94, 1
      %p98 = scmp.eq.s32.totalorder %s18, 1
      %p99 = scmp.ne.s32.totalorder %s94, %s96
      %p100 = scmp.eq.s32.totalorder %s18, 0
      %p101 = por %p99, %p100
      %p102 = scmp.ne.s32.totalorder %s94, %s96
      %p103 = scmp.eq.s32.totalorder %s23, 1
      %p104 = por %p102, %p103
      %p105 = scmp.ne.s32.totalorder %s96, %s97
      %p106 = scmp.eq.s32.totalorder %s23, 0
      %p107 = por %p105, %p106
      %p108 = scmp.ne.s32.totalorder %s96, %s97
      %p109 = scmp.eq.s32.totalorder %s24, 1
      %p110 = por %p108, %p109
      %p112 = scmp.ne.s32.totalorder %s97, %s111
      %p113 = scmp.eq.s32.totalorder %s24, 0
      %p114 = por %p112, %p113
      %s116 = sadd.s32 %s115, 1
      %p119 = scmp.eq.s32.totalorder %s18, 1
      %p120 = scmp.ne.s32.totalorder %s115, %s117
      %p121 = scmp.eq.s32.totalorder %s18, 0
      %p122 = por %p120, %p121
      %p123 = scmp.ne.s32.totalorder %s115, %s117
      %p124 = scmp.eq.s32.totalorder %s23, 1
      %p125 = por %p123, %p124
      %p126 = scmp.ne.s32.totalorder %s117, %s118
      %p127 = scmp.eq.s32.totalorder %s23, 0
      %p128 = por %p126, %p127
      %p129 = scmp.ne.s32.totalorder %s117, %s118
      %p130 = scmp.eq.s32.totalorder %s24, 1
      %p131 = por %p129, %p130
      %p133 = scmp.ne.s32.totalorder %s118, %s132
      %p134 = scmp.eq.s32.totalorder %s24, 0
      %p135 = por %p133, %p134
      %s136 = ssub.s32 %s18, %s25
      %p137 = scmp.eq.s32.totalorder %s136, 0
      %s139 = sadd.s32 %s138, 1
      %s140 = scalar_select %p137, %s138, %s139
      %p143 = pneg %p137
      %p144 = scmp.eq.s32.totalorder %s18, 1
      %p145 = por %p143, %p144
      %p146 = scmp.ne.s32.totalorder %s138, %s141
      %p147 = scmp.eq.s32.totalorder %s18, 0
      %p148 = por %p146, %p147
      %p149 = scmp.ne.s32.totalorder %s138, %s141
      %p150 = scmp.eq.s32.totalorder %s23, 1
      %p151 = por %p149, %p150
      %p152 = scmp.ne.s32.totalorder %s141, %s142
      %p153 = scmp.eq.s32.totalorder %s23, 0
      %p154 = por %p152, %p153
      %p155 = scmp.ne.s32.totalorder %s141, %s142
      %p156 = scmp.eq.s32.totalorder %s24, 1
      %p157 = por %p155, %p156
      %p159 = scmp.ne.s32.totalorder %s142, %s158
      %p160 = scmp.eq.s32.totalorder %s24, 0
      %p161 = por %p159, %p160
      %p162 = scmp.le.s32.totalorder 1, %s18
      %p163 = scmp.lt.s32.totalorder %s18, 3
      %p164 = pnand %p162, %p163
      %p165 = pneg %p164
      // Predicated region
      $region9: #{tpu_custom_call.1} parent=5 // pred_check
        _
      $region10: #{tpu_custom_call.1} parent=5 // pred_check_branch
        %167 = sbr.rel (%p164) target = $region12
      $region11: #{tpu_custom_call.1} parent=5 // pred_region
        %s168 = ssub.s32 %s18, 1
        // Predicated region
        $region13: #{tpu_custom_call.1} parent=11 // pred_check
          %p169 = pneg %p65
        $region14: #{tpu_custom_call.1} parent=11 // pred_check_branch
          %171 = sbr.rel (%p169) target = $region16
        $region15: #{tpu_custom_call.1} parent=11 // pred_region
          %s173 = ssub.s32 512, 512
          %174 = vsyncadd [#allocation6], %s173
          %s175 = sshll.u32 [#allocation5], 4
          %s176 = int_to_ptr.vmem [resolvable:$true] %s175
          %181 = dma.hbm_to_vmem [thread:$0]  %s1, 512, %s176, [#allocation6], 128, 128, 8
        $region16: #{tpu_custom_call.1} parent=11 // pred_fallthru
          _
        // Predicated region
        $region17: #{tpu_custom_call.1} parent=11 // pred_check
          %p182 = pneg %p86
        $region18: #{tpu_custom_call.1} parent=11 // pred_check_branch
          %184 = sbr.rel (%p182) target = $region20
        $region19: #{tpu_custom_call.1} parent=11 // pred_region
          _
        $region20: #{tpu_custom_call.1} parent=11 // pred_fallthru
          _
        // Predicated region
        $region21: #{tpu_custom_call.1} parent=11 // pred_check
          %p185 = pneg %p107
        $region22: #{tpu_custom_call.1} parent=11 // pred_check_branch
          %187 = sbr.rel (%p185) target = $region24
        $region23: #{tpu_custom_call.1} parent=11 // pred_region
          %s189 = ssub.s32 2048, 2048
          %190 = vsyncadd [#allocation6], %s189
          %s191 = sshll.u32 [#allocation7], 4
          %s192 = int_to_ptr.vmem [resolvable:$true] %s191
          %197 = dma.hbm_to_vmem [thread:$0]  %s3, 2048, %s192, [#allocation6], 128, 128, 8
        $region24: #{tpu_custom_call.1} parent=11 // pred_fallthru
          _
        // Predicated region
        $region25: #{tpu_custom_call.1} parent=11 // pred_check
          %p198 = pneg %p128
        $region26: #{tpu_custom_call.1} parent=11 // pred_check_branch
          %200 = sbr.rel (%p198) target = $region28
        $region27: #{tpu_custom_call.1} parent=11 // pred_region
          _
        $region28: #{tpu_custom_call.1} parent=11 // pred_fallthru
          _
      $region12: #{tpu_custom_call.1} parent=5 // pred_fallthru
        _
      %p201 = scmp.lt.s32.totalorder %s18, 2
      // Predicated region
      $region29: #{tpu_custom_call.1} parent=5 // pred_check
        %p202 = pneg %p201
      $region30: #{tpu_custom_call.1} parent=5 // pred_check_branch
        %204 = sbr.rel (%p202) target = $region32
      $region31: #{tpu_custom_call.1} parent=5 // pred_region
        // Predicated region
        $region33: #{tpu_custom_call.1} parent=31 // pred_check
          %p205 = pneg %p38
        $region34: #{tpu_custom_call.1} parent=31 // pred_check_branch
          %207 = sbr.rel (%p205) target = $region36
        $region35: #{tpu_custom_call.1} parent=31 // pred_region
          %s208 = sand.u32 %s28, 1
          %s209 = scalar_lea.sflag [#allocation3], %s208
          %s210 = sand.u32 %s28, 1
          %s211 = smul.addr %s210, 8
          %s212 = scalar_lea.vmem [#allocation2], %s211
          %s214 = ssub.s32 128, 128
          %215 = vsyncadd %s209, %s214
          %s216 = smul.addr %s18, 128
          %s217 = scalar_lea.hbm %s0, %s216
          %s219 = sshll.u32 %s212, 4
          %s220 = int_to_ptr.vmem [resolvable:$true] %s219
          %222 = dma.hbm_to_vmem [thread:$0]  %s217, 128, %s220, %s209
        $region36: #{tpu_custom_call.1} parent=31 // pred_fallthru
          _
      $region32: #{tpu_custom_call.1} parent=5 // pred_fallthru
        _
      %p223 = scmp.le.s32.totalorder 1, %s18
      %p224 = scmp.lt.s32.totalorder %s18, 3
      %p225 = pnand %p223, %p224
      %p226 = pneg %p225
      // Predicated region
      $region37: #{tpu_custom_call.1} parent=5 // pred_check
        _
      $region38: #{tpu_custom_call.1} parent=5 // pred_check_branch
        %228 = sbr.rel (%p225) target = $region40
      $region39: #{tpu_custom_call.1} parent=5 // pred_region
        %s229 = ssub.s32 %s18, 1
        %s230 = sand.u32 %s31, 1
        %s231 = scalar_lea.sflag [#allocation3], %s230
        %s232 = sand.u32 %s31, 1
        %s233 = smul.addr %s232, 8
        %s234 = scalar_lea.vmem [#allocation2], %s233
        // Predicated region
        $region41: #{tpu_custom_call.1} parent=39 // pred_check
          %p235 = pneg %p44
        $region42: #{tpu_custom_call.1} parent=39 // pred_check_branch
          %237 = sbr.rel (%p235) target = $region44
        $region43: #{tpu_custom_call.1} parent=39 // pred_region
          %238 = dma.done %s231, 128
        $region44: #{tpu_custom_call.1} parent=39 // pred_fallthru
          _
        // Predicated region
        $region45: #{tpu_custom_call.1} parent=39 // pred_check
          %p239 = pneg %p65
        $region46: #{tpu_custom_call.1} parent=39 // pred_check_branch
          %241 = sbr.rel (%p239) target = $region48
        $region47: #{tpu_custom_call.1} parent=39 // pred_region
          %242 = dma.done [#allocation6], 512
        $region48: #{tpu_custom_call.1} parent=39 // pred_fallthru
          _
        // Predicated region
        $region49: #{tpu_custom_call.1} parent=39 // pred_check
          %p243 = pneg %p107
        $region50: #{tpu_custom_call.1} parent=39 // pred_check_branch
          %245 = sbr.rel (%p243) target = $region52
        $region51: #{tpu_custom_call.1} parent=39 // pred_region
          %246 = dma.done [#allocation6], 2048
        $region52: #{tpu_custom_call.1} parent=39 // pred_fallthru
          _
        %s247 = sand.u32 %s31, 1
        %s248 = scalar_lea.sflag [#allocation3], %s247
        %s249 = sand.u32 %s31, 1
        %s250 = smul.addr %s249, 8
        %s251 = scalar_lea.vmem [#allocation2], %s250
        %p252 = pneg %p44
        %p253 = pneg %p41
        %p254 = pneg %p65
        %p255 = pneg %p62
        %p256 = pneg %p86
        %p257 = pneg %p83
        %p258 = pneg %p107
        %p259 = pneg %p104
        %p260 = pneg %p128
        %p261 = pneg %p125
        %p262 = pneg %p154
        %p263 = pneg %p151
        %s264 = sand.u32 %s141, 1
        %s265 = scalar_lea.sflag [#allocation4], %s264
        %s266 = sand.u32 %s141, 1
        %s267 = smul.addr %s266, 8
        %s268 = scalar_lea.vmem [#allocation8], %s267
        %v269 = vld [vmem:[%s234] sm:$0xff]
        %v270 = vld [vmem:[#allocation5] sm:$0xff]
        %v271 = vld [vmem:[#allocation5 + $0x8] sm:$0xff]
        %v272 = vld [vmem:[#allocation5 + $0x10] sm:$0xff]
        %v273 = vld [vmem:[#allocation5 + $0x18] sm:$0xff]
        %v274 = vld [vmem:[%s2] sm:$0x1]
        %v276 = vlaneseq
        %v277 = vshrl.u32 %v276, 7
        %v278 = vsub.s32 0, %v277
        %v279 = vrot.slane %v274, %v278
        %vm281 = vcmask 261120
        %v283 = vsel %vm281, %v269, 0
        %285 = vmatprep.subr.mxu0 0.0
        %286 = vmatpush1.msra.mxu0 %v270
        %287 = vmatprep.subr.mxu0 0.0
        %288 = vmatpush1.msra.mxu0 %v271
        %289 = vmatprep.subr.mxu0 0.0
        %290 = vmatpush1.msra.mxu0 %v272
        %291 = vmatprep.subr.mxu0 0.0
        %292 = vmatpush1.msra.mxu0 %v273
        %293 = vmatprep.subr.mxu0 0.0
        %294 = vmatpush1.msra.mxu0 0.0
        %295 = vmatprep.subr.mxu0 0.0
        %296 = vmatpush1.msra.mxu0 0.0
        %297 = vmatprep.subr.mxu0 0.0
        %298 = vmatpush1.msra.mxu0 0.0
        %299 = vmatprep.subr.mxu0 0.0
        %300 = vmatpush1.msra.mxu0 0.0
        %301 = vmatprep.subr.mxu0 0.0
        %302 = vmatpush1.msra.mxu0 0.0
        %303 = vmatprep.subr.mxu0 0.0
        %304 = vmatpush1.msra.mxu0 0.0
        %305 = vmatprep.subr.mxu0 0.0
        %306 = vmatpush1.msra.mxu0 0.0
        %307 = vmatprep.subr.mxu0 0.0
        %308 = vmatpush1.msra.mxu0 0.0
        %309 = vmatprep.subr.mxu0 0.0
        %310 = vmatpush1.msra.mxu0 0.0
        %311 = vmatprep.subr.mxu0 0.0
        %312 = vmatpush1.msra.mxu0 0.0
        %313 = vmatprep.subr.mxu0 0.0
        %314 = vmatpush1.msra.mxu0 0.0
        %315 = vmatprep.subr.mxu0 0.0
        %316 = vmatpush1.msra.mxu0 0.0
        %317 = vmatprep.subr.mxu0 0.0
        %318 = vmatpush1.msra.mxu0 0.0
        %319 = vmatprep.subr.mxu0 0.0
        %320 = vmatpush1.msra.mxu0 0.0
        %321 = vmatprep.subr.mxu0 0.0
        %322 = vmatpush1.msra.mxu0 0.0
        %323 = vmatprep.subr.mxu0 0.0
        %324 = vmatpush1.msra.mxu0 0.0
        %325 = vmatprep.subr.mxu0 0.0
        %326 = vmatpush1.msra.mxu0 0.0
        %327 = vmatprep.subr.mxu0 0.0
        %328 = vmatpush1.msra.mxu0 0.0
        %329 = vmatprep.subr.mxu0 0.0
        %330 = vmatpush1.msra.mxu0 0.0
        %331 = vmatprep.subr.mxu0 0.0
        %332 = vmatpush1.msra.mxu0 0.0
        %333 = vmatprep.subr.mxu0 0.0
        %334 = vmatpush1.msra.mxu0 0.0
        %335 = vmatprep.subr.mxu0 0.0
        %336 = vmatpush1.msra.mxu0 0.0
        %337 = vmatprep.subr.mxu0 0.0
        %338 = vmatpush1.msra.mxu0 0.0
        %339 = vmatprep.subr.mxu0 0.0
        %340 = vmatpush1.msra.mxu0 0.0
        %341 = vmatprep.subr.mxu0 0.0
        %342 = vmatpush1.msra.mxu0 0.0
        %343 = vmatprep.subr.mxu0 0.0
        %344 = vmatpush1.msra.mxu0 0.0
        %345 = vmatprep.subr.mxu0 0.0
        %346 = vmatpush1.msra.mxu0 0.0
        %347 = vmatprep.subr.mxu0 0.0
        %348 = vmatpush1.msra.mxu0 0.0
        %349 = vmatprep.mubr.f32.mxu0 0.0
        %350 = vmatmul.mubr.f32.gmra.mrb[0].mxu0 %v283
        %v351 = vpop.f32.mrb[0].mxu0
        %v352 = vadd.f32 %v279, %v351
        %v353 = vpop.f32.mrb[0].mxu0
        %354 = vdwg.mxu0
        %v355 = vmul.f32 %v352, 0.5
        %v356 = vmul.f32 %v352, 0.70710677
        %v357 = verf.f32.pop %v356
        %v358 = vadd.f32 %v357, 1.0
        %v359 = vmul.f32 %v355, %v358
        %v360 = vld [vmem:[#allocation7] sm:$0xff]
        %v361 = vld [vmem:[#allocation7 + $0x8] sm:$0xff]
        %v362 = vld [vmem:[#allocation7 + $0x10] sm:$0xff]
        %v363 = vld [vmem:[#allocation7 + $0x18] sm:$0xff]
        %v364 = vld [vmem:[#allocation7 + $0x20] sm:$0xff]
        %v365 = vld [vmem:[#allocation7 + $0x28] sm:$0xff]
        %v366 = vld [vmem:[#allocation7 + $0x30] sm:$0xff]
        %v367 = vld [vmem:[#allocation7 + $0x38] sm:$0xff]
        %v368 = vld [vmem:[#allocation7 + $0x40] sm:$0xff]
        %v369 = vld [vmem:[#allocation7 + $0x48] sm:$0xff]
        %v370 = vld [vmem:[#allocation7 + $0x50] sm:$0xff]
        %v371 = vld [vmem:[#allocation7 + $0x58] sm:$0xff]
        %v372 = vld [vmem:[#allocation7 + $0x60] sm:$0xff]
        %v373 = vld [vmem:[#allocation7 + $0x68] sm:$0xff]
        %v374 = vld [vmem:[#allocation7 + $0x70] sm:$0xff]
        %v375 = vld [vmem:[#allocation7 + $0x78] sm:$0xff]
        %v376 = vld [vmem:[%s4] sm:$0x1]
        %v378 = vlaneseq
        %v379 = vshrl.u32 %v378, 7
        %v380 = vsub.s32 0, %v379
        %v381 = vrot.slane %v376, %v380
        %383 = vmatprep.subr.mxu0 0.0
        %384 = vmatpush1.msra.mxu0 %v360
        %385 = vmatprep.subr.mxu0 0.0
        %386 = vmatpush1.msra.mxu0 %v361
        %387 = vmatprep.subr.mxu0 0.0
        %388 = vmatpush1.msra.mxu0 %v362
        %389 = vmatprep.subr.mxu0 0.0
        %390 = vmatpush1.msra.mxu0 %v363
        %391 = vmatprep.subr.mxu0 0.0
        %392 = vmatpush1.msra.mxu0 %v364
        %393 = vmatprep.subr.mxu0 0.0
        %394 = vmatpush1.msra.mxu0 %v365
        %395 = vmatprep.subr.mxu0 0.0
        %396 = vmatpush1.msra.mxu0 %v366
        %397 = vmatprep.subr.mxu0 0.0
        %398 = vmatpush1.msra.mxu0 %v367
        %399 = vmatprep.subr.mxu0 0.0
        %400 = vmatpush1.msra.mxu0 %v368
        %401 = vmatprep.subr.mxu0 0.0
        %402 = vmatpush1.msra.mxu0 %v369
        %403 = vmatprep.subr.mxu0 0.0
        %404 = vmatpush1.msra.mxu0 %v370
        %405 = vmatprep.subr.mxu0 0.0
        %406 = vmatpush1.msra.mxu0 %v371
        %407 = vmatprep.subr.mxu0 0.0
        %408 = vmatpush1.msra.mxu0 %v372
        %409 = vmatprep.subr.mxu0 0.0
        %410 = vmatpush1.msra.mxu0 %v373
        %411 = vmatprep.subr.mxu0 0.0
        %412 = vmatpush1.msra.mxu0 %v374
        %413 = vmatprep.subr.mxu0 0.0
        %414 = vmatpush1.msra.mxu0 %v375
        %415 = vmatprep.subr.mxu0 0.0
        %416 = vmatpush1.msra.mxu0 0.0
        %417 = vmatprep.subr.mxu0 0.0
        %418 = vmatpush1.msra.mxu0 0.0
        %419 = vmatprep.subr.mxu0 0.0
        %420 = vmatpush1.msra.mxu0 0.0
        %421 = vmatprep.subr.mxu0 0.0
        %422 = vmatpush1.msra.mxu0 0.0
        %423 = vmatprep.subr.mxu0 0.0
        %424 = vmatpush1.msra.mxu0 0.0
        %425 = vmatprep.subr.mxu0 0.0
        %426 = vmatpush1.msra.mxu0 0.0
        %427 = vmatprep.subr.mxu0 0.0
        %428 = vmatpush1.msra.mxu0 0.0
        %429 = vmatprep.subr.mxu0 0.0
        %430 = vmatpush1.msra.mxu0 0.0
        %431 = vmatprep.subr.mxu0 0.0
        %432 = vmatpush1.msra.mxu0 0.0
        %433 = vmatprep.subr.mxu0 0.0
        %434 = vmatpush1.msra.mxu0 0.0
        %435 = vmatprep.subr.mxu0 0.0
        %436 = vmatpush1.msra.mxu0 0.0
        %437 = vmatprep.subr.mxu0 0.0
        %438 = vmatpush1.msra.mxu0 0.0
        %439 = vmatprep.subr.mxu0 0.0
        %440 = vmatpush1.msra.mxu0 0.0
        %441 = vmatprep.subr.mxu0 0.0
        %442 = vmatpush1.msra.mxu0 0.0
        %443 = vmatprep.subr.mxu0 0.0
        %444 = vmatpush1.msra.mxu0 0.0
        %445 = vmatprep.subr.mxu0 0.0
        %446 = vmatpush1.msra.mxu0 0.0
        %447 = vmatprep.mubr.f32.mxu0 0.0
        %448 = vmatmul.mubr.f32.gmra.mrb[0].mxu0 %v359
        %v449 = vpop.f32.mrb[0].mxu0
        %v450 = vadd.f32 %v381, %v449
        %v451 = vpop.f32.mrb[0].mxu0
        %452 = vdwg.mxu0
        %453 = vst [vmem:[%s268] sm:$0xff] %v450
        %s454 = sand.u32 %s141, 1
        %s455 = scalar_lea.sflag [#allocation4], %s454
        %s456 = sand.u32 %s141, 1
        %s457 = smul.addr %s456, 8
        %s458 = scalar_lea.vmem [#allocation8], %s457
        // Predicated region
        $region53: #{tpu_custom_call.1} parent=39 // pred_check
          %p459 = pneg %p151
        $region54: #{tpu_custom_call.1} parent=39 // pred_check_branch
          %461 = sbr.rel (%p459) target = $region56
        $region55: #{tpu_custom_call.1} parent=39 // pred_region
          %s463 = ssub.s32 128, 128
          %464 = vsyncadd %s455, %s463
          %s465 = smul.addr %s23, 128
          %s466 = scalar_lea.hbm %s5, %s465
          %s468 = sshll.u32 %s458, 4
          %s469 = int_to_ptr.vmem [resolvable:$true] %s468
          %471 = dma.vmem_to_hbm [thread:$0]  %s469, 128, %s466, %s455
        $region56: #{tpu_custom_call.1} parent=39 // pred_fallthru
          _
      $region40: #{tpu_custom_call.1} parent=5 // pred_fallthru
        _
      %p472 = scmp.le.s32.totalorder 2, %s18
      // Predicated region
      $region57: #{tpu_custom_call.1} parent=5 // pred_check
        %p473 = pneg %p472
      $region58: #{tpu_custom_call.1} parent=5 // pred_check_branch
        %475 = sbr.rel (%p473) target = $region60
      $region59: #{tpu_custom_call.1} parent=5 // pred_region
        %s476 = ssub.s32 %s18, 2
        // Predicated region
        $region61: #{tpu_custom_call.1} parent=59 // pred_check
          %p477 = pneg %p157
        $region62: #{tpu_custom_call.1} parent=59 // pred_check_branch
          %479 = sbr.rel (%p477) target = $region64
        $region63: #{tpu_custom_call.1} parent=59 // pred_region
          %s480 = sand.u32 %s142, 1
          %s481 = scalar_lea.sflag [#allocation4], %s480
          %s482 = sand.u32 %s142, 1
          %s483 = smul.addr %s482, 8
          %s484 = scalar_lea.vmem [#allocation8], %s483
          %485 = dma.done %s481, 128
        $region64: #{tpu_custom_call.1} parent=59 // pred_fallthru
          _
      $region60: #{tpu_custom_call.1} parent=5 // pred_fallthru
        _
    $region6: #{tpu_custom_call.1} parent=1 // loop_footer
      %s22 = sadd.s32 1, %s18
    $region7: #{tpu_custom_call.1} parent=1 // loop_footer_branch
      %17 = sbr.rel target = $region3
    $region8: #{tpu_custom_call.1} parent=1 // loop_exit
      _
    %486 = vsyncpa [#allocation3], 1
    %s487 = scalar_lea.sflag [#allocation3], 1
    %488 = vsyncpa %s487, 1
    %489 = vsyncpa [#allocation6], 1
    %490 = vsyncpa [#allocation4], 1
    %s491 = scalar_lea.sflag [#allocation4], 1
    %492 = vsyncpa %s491, 1

</llo_original>
